<compile_context>
chip_gen: v7x
topology: tpu7x:2x2x1
jax: 0.10.0
libtpu: 0.0.40
codegen_flags: <defaults>
</compile_context>

<pallas_src>
import jax
import jax.numpy as jnp
from jax.experimental import pallas as pl
from jax.experimental.pallas import tpu as pltpu


def _cdiv(a, b):
    return -(-a // b)


def _round_up(a, m):
    return _cdiv(a, m) * m


def _combine_kernel(a_ref, b_ref, w1_ref, w2_ref, bias_ref, o_ref):
    # a_ref: (1, C1, T) slice of inp1 (ReLU applied here, to inp1 only)
    # b_ref: (1, C2, T) slice of inp2
    # w1_ref: (F, C1), w2_ref: (F, C2), bias_ref: (F, 1), o_ref: (1, F, T)
    a = jnp.maximum(a_ref[0], 0)                       # ReLU on inp1 only
    acc = jnp.dot(w1_ref[...], a, preferred_element_type=jnp.float32)
    acc = acc + jnp.dot(w2_ref[...], b_ref[0],
                        preferred_element_type=jnp.float32)
    o_ref[0] = (acc + bias_ref[...]).astype(o_ref.dtype)


def _vmem_budget_and_limit():
    """(tile-sizing budget, vmem_limit_bytes), conservative across
    v5e/v6e (128 MiB physical VMEM) and v7x (64 MiB physical VMEM)."""
    budget = 24 << 20
    limit = 48 << 20
    try:  # best-effort per-generation refinement; safe fallback otherwise
        cap = pltpu.get_tpu_info().vmem_capacity_bytes
        limit = max(16 << 20, min(limit, int(cap) * 3 // 4))
        budget = max(8 << 20, min(budget, int(cap) * 2 // 5))
    except Exception:
        pass
    return budget, limit


def _pick_hw_tile(HW, N, C1, C2, F, in1_bytes, in2_bytes, out_bytes, budget):
    """Largest 128-multiple spatial tile fitting the VMEM budget."""
    # Per-lane VMEM bytes for one grid step:
    #   double-buffered input blocks + double-buffered output block
    #   + f32 ReLU temp + two f32 matmul intermediates.
    per_lane = (2 * (C1 * in1_bytes + C2 * in2_bytes)
                + 2 * F * out_bytes
                + (C1 + 2 * F) * 4)
    hw_pad = _round_up(HW, 128)
    tile = max(128, min((budget // per_lane) // 128 * 128, hw_pad))
    # Keep at least 2 total grid steps when possible so v7x's two TensorCores
    # both get work (dimension_semantics are "parallel").
    if N * _cdiv(HW, tile) < 2 and hw_pad >= 256:
        tile = _round_up(_cdiv(HW, 2), 128)
    return tile


def combine_forward(inp1, inp2, weight, bias, *, hw_tile=None):
    """Pallas port of Combine.forward.

    inp1: [N, C1, H, W] (ReLU applied), inp2: [N, C2, H, W],
    weight: [F, C1+C2] (1x1-conv weight), bias: [F].
    Returns [N, F, H, W] in inp1's dtype."""
    N, C1, H, W = inp1.shape
    N2, C2, H2, W2 = inp2.shape
    assert (N2, H2, W2) == (N, H, W)
    F = weight.shape[0]
    assert weight.shape[1] == C1 + C2
    HW = H * W
    out_dtype = inp1.dtype

    i1b = jnp.dtype(inp1.dtype).itemsize
    i2b = jnp.dtype(inp2.dtype).itemsize
    ob = jnp.dtype(out_dtype).itemsize

    budget, vmem_limit = _vmem_budget_and_limit()
    if hw_tile is None:
        hw_tile = _pick_hw_tile(HW, N, C1, C2, F, i1b, i2b, ob, budget)

    # NCHW is already [N, C, H*W] contiguous: reshapes are free, no transpose
    # and no padding pass over the activations in HBM.
    a = inp1.reshape(N, C1, HW)
    b = inp2.reshape(N, C2, HW)

    # Split the 1x1-conv weight along its input-channel axis (concat order):
    # out = W1 @ relu(inp1) + W2 @ inp2 + bias == W @ cat(relu(inp1), inp2).
    # (Tiny one-time copies; keeps both dot operands lane-aligned in VMEM and
    #  keeps the two-dot structure that avoids any concat copy.)
    w1 = weight[:, :C1]
    w2 = weight[:, C1:]
    bias2d = bias.reshape(F, 1).astype(jnp.float32)

    grid = (N, _cdiv(HW, hw_tile))

    cost = pl.CostEstimate(
        flops=2 * N * HW * F * (C1 + C2),
        transcendentals=0,
        bytes_accessed=(N * HW * (C1 * i1b + C2 * i2b + F * ob)
                        + weight.size * jnp.dtype(weight.dtype).itemsize
                        + F * 4),
    )

    out = pl.pallas_call(
        _combine_kernel,
        out_shape=jax.ShapeDtypeStruct((N, F, HW), out_dtype),
        grid_spec=pltpu.PrefetchScalarGridSpec(
            num_scalar_prefetch=0,
            grid=grid,
            in_specs=[
                pl.BlockSpec((1, C1, hw_tile), lambda n, j: (n, 0, j)),
                pl.BlockSpec((1, C2, hw_tile), lambda n, j: (n, 0, j)),
                pl.BlockSpec((F, C1), lambda n, j: (0, 0)),
                pl.BlockSpec((F, C2), lambda n, j: (0, 0)),
                pl.BlockSpec((F, 1), lambda n, j: (0, 0)),
            ],
            out_specs=pl.BlockSpec((1, F, hw_tile), lambda n, j: (n, 0, j)),
        ),
        compiler_params=pltpu.CompilerParams(
            dimension_semantics=("parallel", "parallel"),
            vmem_limit_bytes=vmem_limit),
        cost_estimate=cost,
    )(a, b, w1, w2, bias2d)

    # [N, F, H*W] -> [N, F, H, W] (free reshape, already NCHW-ordered).
    return out.reshape(N, F, H, W)


def _reference(inp1, inp2, weight, bias):
    # Pure-JAX reference reproducing PyTorch semantics exactly.
    x = jnp.concatenate([jnp.maximum(inp1, 0.0), inp2], axis=1)  # NCHW concat
    return jnp.einsum("fc,nchw->nfhw", weight, x) + bias[None, :, None, None]


if __name__ == "__main__":
    key = jax.random.PRNGKey(0)
    k1, k2, k3, k4 = jax.random.split(key, 4)

    # Two feature maps of 4 channels each -> in_ch = 8, filter = 8.
    N, C1, C2, H, W = 2, 4, 4, 16, 16
    in_ch, filt = C1 + C2, 8

    inp1 = jax.random.normal(k1, (N, C1, H, W), dtype=jnp.float32)
    inp2 = jax.random.normal(k2, (N, C2, H, W), dtype=jnp.float32)

    # Deterministic Conv2d(in_ch, filter, kernel_size=1) parameters.
    bound = 1.0 / (in_ch ** 0.5)
    weight = jax.random.uniform(k3, (filt, in_ch), jnp.float32, -bound, bound)
    bias = jax.random.uniform(k4, (filt,), jnp.float32, -bound, bound)

    # Case 1: lane-divisible spatial extent (H*W = 256).
    out = jax.block_until_ready(combine_forward(inp1, inp2, weight, bias))
    ref = _reference(inp1, inp2, weight, bias)
    assert out.shape == (N, filt, H, W), out.shape
    assert out.dtype == inp1.dtype, out.dtype
    assert jnp.allclose(out, ref, atol=1e-5, rtol=1e-5), "mismatch (case 1)"

    # Case 2: ragged spatial extent (H*W = 196, not a multiple of 128)
    #         exercises the cdiv grid / ragged-last-block path.
    H2, W2 = 14, 14
    inp1b = jax.random.normal(k1, (N, C1, H2, W2), dtype=jnp.float32)
    inp2b = jax.random.normal(k2, (N, C2, H2, W2), dtype=jnp.float32)
    outb = jax.block_until_ready(combine_forward(inp1b, inp2b, weight, bias))
    refb = _reference(inp1b, inp2b, weight, bias)
    assert outb.shape == (N, filt, H2, W2), outb.shape
    assert jnp.allclose(outb, refb, atol=1e-5, rtol=1e-5), "mismatch (case 2)"

    # Case 3: bf16 I/O (output dtype follows inp1), f32 accumulation inside.
    inp1c = inp1.astype(jnp.bfloat16)
    inp2c = inp2.astype(jnp.bfloat16)
    wc = weight.astype(jnp.bfloat16)
    outc = jax.block_until_ready(combine_forward(inp1c, inp2c, wc, bias))
    assert outc.dtype == jnp.bfloat16, outc.dtype
    refc = _reference(inp1c.astype(jnp.float32), inp2c.astype(jnp.float32),
                      wc.astype(jnp.float32), bias)
    assert jnp.allclose(outc.astype(jnp.float32), refc, atol=3e-2, rtol=3e-2), \
        "mismatch (case 3, bf16)"

    print("KERNEL_OK")
</pallas_src>

<mosaic_0001>
module attributes {stable_mosaic.version = 11 : i64} {
  func.func @_combine_kernel(%arg0: i32, %arg1: i32, %arg2: memref<1x4x256xf32, #tpu.memory_space<vmem>>, %arg3: memref<1x4x256xf32, #tpu.memory_space<vmem>>, %arg4: memref<8x4xf32, #tpu.memory_space<vmem>>, %arg5: memref<8x4xf32, #tpu.memory_space<vmem>>, %arg6: memref<8x1xf32, #tpu.memory_space<vmem>>, %arg7: memref<1x8x256xf32, #tpu.memory_space<vmem>>) attributes {dimension_semantics = [#tpu.dimension_semantics<parallel>, #tpu.dimension_semantics<parallel>], iteration_bounds = array<i64: 2, 1>, scalar_prefetch = 0 : i64, scratch_operands = 0 : i64, tpu.core_type = #tpu.core_type<tc>, window_params = [{transform_indices = @transform_0, window_bounds = array<i64: 1, 4, 256>}, {transform_indices = @transform_1, window_bounds = array<i64: 1, 4, 256>}, {pipeline_mode = #tpu.pipeline_mode<synchronous>, transform_indices = @transform_2, window_bounds = array<i64: 8, 4>}, {pipeline_mode = #tpu.pipeline_mode<synchronous>, transform_indices = @transform_3, window_bounds = array<i64: 8, 4>}, {pipeline_mode = #tpu.pipeline_mode<synchronous>, transform_indices = @transform_4, window_bounds = array<i64: 8, 1>}, {transform_indices = @transform_5, window_bounds = array<i64: 1, 8, 256>}]} {
    %c0 = arith.constant 0 : index
    %c0_0 = arith.constant 0 : index
    %c0_1 = arith.constant 0 : index
    %0 = vector.load %arg2[%c0, %c0_0, %c0_1] : memref<1x4x256xf32, #tpu.memory_space<vmem>>, vector<1x4x256xf32>
    %1 = vector.shape_cast %0 : vector<1x4x256xf32> to vector<4x256xf32>
    %cst = arith.constant 0.000000e+00 : f32
    %2 = vector.broadcast %cst : f32 to vector<4x256xf32>
    %3 = arith.maximumf %1, %2 : vector<4x256xf32>
    %c0_2 = arith.constant 0 : index
    %c0_3 = arith.constant 0 : index
    %4 = vector.load %arg4[%c0_2, %c0_3] : memref<8x4xf32, #tpu.memory_space<vmem>>, vector<8x4xf32>
    %cst_4 = arith.constant dense<0.000000e+00> : vector<8x256xf32>
    %5 = tpu.matmul %4, %3, %cst_4 {dimension_numbers = #tpu.dot_dimension_numbers<[1], [0], [0], [1], [0, 0, 1, 1], [], []>} : vector<8x4xf32>, vector<4x256xf32>, vector<8x256xf32> -> vector<8x256xf32>
    %c0_5 = arith.constant 0 : index
    %c0_6 = arith.constant 0 : index
    %6 = vector.load %arg5[%c0_5, %c0_6] : memref<8x4xf32, #tpu.memory_space<vmem>>, vector<8x4xf32>
    %c0_7 = arith.constant 0 : index
    %c0_8 = arith.constant 0 : index
    %c0_9 = arith.constant 0 : index
    %7 = vector.load %arg3[%c0_7, %c0_8, %c0_9] : memref<1x4x256xf32, #tpu.memory_space<vmem>>, vector<1x4x256xf32>
    %8 = vector.shape_cast %7 : vector<1x4x256xf32> to vector<4x256xf32>
    %cst_10 = arith.constant dense<0.000000e+00> : vector<8x256xf32>
    %9 = tpu.matmul %6, %8, %cst_10 {dimension_numbers = #tpu.dot_dimension_numbers<[1], [0], [0], [1], [0, 0, 1, 1], [], []>} : vector<8x4xf32>, vector<4x256xf32>, vector<8x256xf32> -> vector<8x256xf32>
    %10 = arith.addf %5, %9 : vector<8x256xf32>
    %c0_11 = arith.constant 0 : index
    %c0_12 = arith.constant 0 : index
    %11 = vector.load %arg6[%c0_11, %c0_12] : memref<8x1xf32, #tpu.memory_space<vmem>>, vector<8x1xf32>
    %12 = vector.broadcast %11 : vector<8x1xf32> to vector<8x256xf32>
    %13 = arith.addf %10, %12 : vector<8x256xf32>
    %c0_13 = arith.constant 0 : index
    %c0_14 = arith.constant 0 : index
    %c0_15 = arith.constant 0 : index
    %14 = vector.load %arg7[%c0_13, %c0_14, %c0_15] : memref<1x8x256xf32, #tpu.memory_space<vmem>>, vector<1x8x256xf32>
    %15 = vector.shape_cast %14 : vector<1x8x256xf32> to vector<8x256xf32>
    %16 = vector.shape_cast %13 : vector<8x256xf32> to vector<1x8x256xf32>
    tpu.vector_store %arg7[%c0_13, %c0_14, %c0_15], %16 {strides = array<i32>} : memref<1x8x256xf32, #tpu.memory_space<vmem>>, vector<1x8x256xf32>,
    return
  }
  func.func @transform_0(%arg0: i32, %arg1: i32) -> (i32, i32, i32) {
    %c0_i32 = arith.constant 0 : i32
    %c0_i32_0 = arith.constant 0 : i32
    return %arg0, %c0_i32, %arg1 : i32, i32, i32
  }
  func.func @transform_1(%arg0: i32, %arg1: i32) -> (i32, i32, i32) {
    %c0_i32 = arith.constant 0 : i32
    %c0_i32_0 = arith.constant 0 : i32
    return %arg0, %c0_i32, %arg1 : i32, i32, i32
  }
  func.func @transform_2(%arg0: i32, %arg1: i32) -> (i32, i32) {
    %c0_i32 = arith.constant 0 : i32
    %c0_i32_0 = arith.constant 0 : i32
    %c0_i32_1 = arith.constant 0 : i32
    return %c0_i32, %c0_i32_0 : i32, i32
  }
  func.func @transform_3(%arg0: i32, %arg1: i32) -> (i32, i32) {
    %c0_i32 = arith.constant 0 : i32
    %c0_i32_0 = arith.constant 0 : i32
    %c0_i32_1 = arith.constant 0 : i32
    return %c0_i32, %c0_i32_0 : i32, i32
  }
  func.func @transform_4(%arg0: i32, %arg1: i32) -> (i32, i32) {
    %c0_i32 = arith.constant 0 : i32
    %c0_i32_0 = arith.constant 0 : i32
    %c0_i32_1 = arith.constant 0 : i32
    return %c0_i32, %c0_i32_0 : i32, i32
  }
  func.func @transform_5(%arg0: i32, %arg1: i32) -> (i32, i32, i32) {
    %c0_i32 = arith.constant 0 : i32
    %c0_i32_0 = arith.constant 0 : i32
    return %arg0, %c0_i32, %arg1 : i32, i32, i32
  }
}

</mosaic_0001>

<llo_original>
// kernel: tpu_custom_call.1
$region0: #{tpu_custom_call.1}
  #allocation0 [shape = 'u32[]', space=smem, size = 0x4, offset = 0x4, fixed_abs, tag = 'smem constant byte address 0x4 - core index']
  #allocation1 [shape = 'u32[144,128]{1,0:T(1,128)}', space=vmem, size = 0x12000, scoped, tag = 'internal scratch']
  %s0 = inlined_call_operand.vmem [shape: f32[2,4,256], index: 0, kind: input, shape index: {}]
  %s1 = inlined_call_operand.vmem [shape: f32[2,4,256], index: 1, kind: input, shape index: {}]
  %s2 = inlined_call_operand.vmem [shape: f32[8,4], index: 2, kind: input, shape index: {}]
  %s3 = inlined_call_operand.vmem [shape: f32[8,4], index: 3, kind: input, shape index: {}]
  %s4 = inlined_call_operand.vmem [shape: f32[8,1], index: 4, kind: input, shape index: {}]
  %s5 = inlined_call_operand.hbm [shape: f32[2,8,256], index: 5, kind: output, shape index: {}]
  %s6 = sld [smem:[#allocation0]]
  $region53: #{tpu_custom_call.1} parent=0
    _
  %s8 = ssub.s32 1, %s6
  %s9 = scalar_select 0, %s8, %s6
  $region1: #{tpu_custom_call.1} parent=0
    #allocation2 [shape = 'u8[16384]{0}', space=vmem, size = 0x4000, scoped, tag = 'output window, operand 0']
    #allocation3 [shape = 's32[2]{0}', space=sflag, size = 0x8, scoped, tag = 'scoped memory for tpu_custom_call.1']
    %10 = vsyncpa [#allocation3], 0
    %s11 = scalar_lea.sflag [#allocation3], 1
    %12 = vsyncpa %s11, 0
    loop: start=0, step=1, limit=4
    $region2: #{tpu_custom_call.1} parent=1 // loop_pre_header
      _
    $region3: #{tpu_custom_call.1} parent=1 // loop_header
      %s14 = sphi 0, %s18
      %p15 = scmp.ge.s32.totalorder %s14, 4
      %s21 = sphi 0, %s33
      %s22 = sphi 0, %s29
      %s23 = sphi 0, %s21
      %s24 = sphi 0, %s22
      %s25 = sphi 0, %s23
      %s26 = sphi 0, %s24
      %s38 = sphi 0, %s40
      %s41 = sphi 0, %s38
      %s42 = sphi 0, %s41
      %s58 = sphi 0, %s42
      %s66 = sphi 0, %s68
      %s69 = sphi 0, %s66
      %s70 = sphi 0, %s69
      %s86 = sphi 0, %s70
      %s90 = sphi 0, %s90
      %s92 = sphi 0, %s90
      %s93 = sphi 0, %s92
      %s107 = sphi 0, %s93
      %s111 = sphi 0, %s111
      %s113 = sphi 0, %s111
      %s114 = sphi 0, %s113
      %s128 = sphi 0, %s114
      %s132 = sphi 0, %s132
      %s134 = sphi 0, %s132
      %s135 = sphi 0, %s134
      %s149 = sphi 0, %s135
      %s157 = sphi 0, %s159
      %s160 = sphi 0, %s157
      %s161 = sphi 0, %s160
      %s177 = sphi 0, %s161
    $region4: #{tpu_custom_call.1} parent=1 // loop_header_branch
      %17 = sbr.rel (%p15) target = $region8
    $region5: #{tpu_custom_call.1} parent=1 // loop_body
      %s19 = ssub.s32 %s14, 1
      %s20 = ssub.s32 %s14, 2
      %s27 = sadd.s32 1, %s22
      %p28 = scmp.ge.s32.totalorder %s27, 1
      %s29 = scalar_select %p28, 0, %s27
      %s30 = sadd.s32 1, %s21
      %s31 = scalar_select %p28, %s30, %s21
      %p32 = scmp.ge.s32.totalorder %s31, 2
      %s33 = scalar_select %p32, 0, %s31
      %s34 = ssub.s32 %s21, %s33
      %s35 = ssub.s32 %s22, %s29
      %s36 = sor.u32 %s34, %s35
      %p37 = scmp.eq.s32.totalorder %s36, 0
      %s39 = sadd.s32 %s38, 1
      %s40 = scalar_select %p37, %s38, %s39
      %p43 = pneg %p37
      %p44 = scmp.eq.s32.totalorder %s14, 1
      %p45 = por %p43, %p44
      %p46 = scmp.ne.s32.totalorder %s38, %s41
      %p47 = scmp.eq.s32.totalorder %s14, 0
      %p48 = por %p46, %p47
      %p49 = scmp.ne.s32.totalorder %s38, %s41
      %p50 = scmp.eq.s32.totalorder %s19, 1
      %p51 = por %p49, %p50
      %p52 = scmp.ne.s32.totalorder %s41, %s42
      %p53 = scmp.eq.s32.totalorder %s19, 0
      %p54 = por %p52, %p53
      %p55 = scmp.ne.s32.totalorder %s41, %s42
      %p56 = scmp.eq.s32.totalorder %s20, 1
      %p57 = por %p55, %p56
      %p59 = scmp.ne.s32.totalorder %s42, %s58
      %p60 = scmp.eq.s32.totalorder %s20, 0
      %p61 = por %p59, %p60
      %s62 = ssub.s32 %s21, %s33
      %s63 = ssub.s32 %s22, %s29
      %s64 = sor.u32 %s62, %s63
      %p65 = scmp.eq.s32.totalorder %s64, 0
      %s67 = sadd.s32 %s66, 1
      %s68 = scalar_select %p65, %s66, %s67
      %p71 = pneg %p65
      %p72 = scmp.eq.s32.totalorder %s14, 1
      %p73 = por %p71, %p72
      %p74 = scmp.ne.s32.totalorder %s66, %s69
      %p75 = scmp.eq.s32.totalorder %s14, 0
      %p76 = por %p74, %p75
      %p77 = scmp.ne.s32.totalorder %s66, %s69
      %p78 = scmp.eq.s32.totalorder %s19, 1
      %p79 = por %p77, %p78
      %p80 = scmp.ne.s32.totalorder %s69, %s70
      %p81 = scmp.eq.s32.totalorder %s19, 0
      %p82 = por %p80, %p81
      %p83 = scmp.ne.s32.totalorder %s69, %s70
      %p84 = scmp.eq.s32.totalorder %s20, 1
      %p85 = por %p83, %p84
      %p87 = scmp.ne.s32.totalorder %s70, %s86
      %p88 = scmp.eq.s32.totalorder %s20, 0
      %p89 = por %p87, %p88
      %s91 = sadd.s32 %s90, 1
      %p94 = scmp.eq.s32.totalorder %s14, 1
      %p95 = scmp.ne.s32.totalorder %s90, %s92
      %p96 = scmp.eq.s32.totalorder %s14, 0
      %p97 = por %p95, %p96
      %p98 = scmp.ne.s32.totalorder %s90, %s92
      %p99 = scmp.eq.s32.totalorder %s19, 1
      %p100 = por %p98, %p99
      %p101 = scmp.ne.s32.totalorder %s92, %s93
      %p102 = scmp.eq.s32.totalorder %s19, 0
      %p103 = por %p101, %p102
      %p104 = scmp.ne.s32.totalorder %s92, %s93
      %p105 = scmp.eq.s32.totalorder %s20, 1
      %p106 = por %p104, %p105
      %p108 = scmp.ne.s32.totalorder %s93, %s107
      %p109 = scmp.eq.s32.totalorder %s20, 0
      %p110 = por %p108, %p109
      %s112 = sadd.s32 %s111, 1
      %p115 = scmp.eq.s32.totalorder %s14, 1
      %p116 = scmp.ne.s32.totalorder %s111, %s113
      %p117 = scmp.eq.s32.totalorder %s14, 0
      %p118 = por %p116, %p117
      %p119 = scmp.ne.s32.totalorder %s111, %s113
      %p120 = scmp.eq.s32.totalorder %s19, 1
      %p121 = por %p119, %p120
      %p122 = scmp.ne.s32.totalorder %s113, %s114
      %p123 = scmp.eq.s32.totalorder %s19, 0
      %p124 = por %p122, %p123
      %p125 = scmp.ne.s32.totalorder %s113, %s114
      %p126 = scmp.eq.s32.totalorder %s20, 1
      %p127 = por %p125, %p126
      %p129 = scmp.ne.s32.totalorder %s114, %s128
      %p130 = scmp.eq.s32.totalorder %s20, 0
      %p131 = por %p129, %p130
      %s133 = sadd.s32 %s132, 1
      %p136 = scmp.eq.s32.totalorder %s14, 1
      %p137 = scmp.ne.s32.totalorder %s132, %s134
      %p138 = scmp.eq.s32.totalorder %s14, 0
      %p139 = por %p137, %p138
      %p140 = scmp.ne.s32.totalorder %s132, %s134
      %p141 = scmp.eq.s32.totalorder %s19, 1
      %p142 = por %p140, %p141
      %p143 = scmp.ne.s32.totalorder %s134, %s135
      %p144 = scmp.eq.s32.totalorder %s19, 0
      %p145 = por %p143, %p144
      %p146 = scmp.ne.s32.totalorder %s134, %s135
      %p147 = scmp.eq.s32.totalorder %s20, 1
      %p148 = por %p146, %p147
      %p150 = scmp.ne.s32.totalorder %s135, %s149
      %p151 = scmp.eq.s32.totalorder %s20, 0
      %p152 = por %p150, %p151
      %s153 = ssub.s32 %s21, %s33
      %s154 = ssub.s32 %s22, %s29
      %s155 = sor.u32 %s153, %s154
      %p156 = scmp.eq.s32.totalorder %s155, 0
      %s158 = sadd.s32 %s157, 1
      %s159 = scalar_select %p156, %s157, %s158
      %p162 = pneg %p156
      %p163 = scmp.eq.s32.totalorder %s14, 1
      %p164 = por %p162, %p163
      %p165 = scmp.ne.s32.totalorder %s157, %s160
      %p166 = scmp.eq.s32.totalorder %s14, 0
      %p167 = por %p165, %p166
      %p168 = scmp.ne.s32.totalorder %s157, %s160
      %p169 = scmp.eq.s32.totalorder %s19, 1
      %p170 = por %p168, %p169
      %p171 = scmp.ne.s32.totalorder %s160, %s161
      %p172 = scmp.eq.s32.totalorder %s19, 0
      %p173 = por %p171, %p172
      %p174 = scmp.ne.s32.totalorder %s160, %s161
      %p175 = scmp.eq.s32.totalorder %s20, 1
      %p176 = por %p174, %p175
      %p178 = scmp.ne.s32.totalorder %s161, %s177
      %p179 = scmp.eq.s32.totalorder %s20, 0
      %p180 = por %p178, %p179
      %p181 = scmp.le.s32.totalorder 1, %s14
      %p182 = scmp.lt.s32.totalorder %s14, 3
      %p183 = pnand %p181, %p182
      %p184 = pneg %p183
      // Predicated region
      $region9: #{tpu_custom_call.1} parent=5 // pred_check
        _
      $region10: #{tpu_custom_call.1} parent=5 // pred_check_branch
        %186 = sbr.rel (%p183) target = $region12
      $region11: #{tpu_custom_call.1} parent=5 // pred_region
        %s187 = ssub.s32 %s14, 1
        // Predicated region
        $region13: #{tpu_custom_call.1} parent=11 // pred_check
          %p188 = pneg %p103
        $region14: #{tpu_custom_call.1} parent=11 // pred_check_branch
          %190 = sbr.rel (%p188) target = $region16
        $region15: #{tpu_custom_call.1} parent=11 // pred_region
          _
        $region16: #{tpu_custom_call.1} parent=11 // pred_fallthru
          _
        // Predicated region
        $region17: #{tpu_custom_call.1} parent=11 // pred_check
          %p191 = pneg %p124
        $region18: #{tpu_custom_call.1} parent=11 // pred_check_branch
          %193 = sbr.rel (%p191) target = $region20
        $region19: #{tpu_custom_call.1} parent=11 // pred_region
          _
        $region20: #{tpu_custom_call.1} parent=11 // pred_fallthru
          _
        // Predicated region
        $region21: #{tpu_custom_call.1} parent=11 // pred_check
          %p194 = pneg %p145
        $region22: #{tpu_custom_call.1} parent=11 // pred_check_branch
          %196 = sbr.rel (%p194) target = $region24
        $region23: #{tpu_custom_call.1} parent=11 // pred_region
          _
        $region24: #{tpu_custom_call.1} parent=11 // pred_fallthru
          _
      $region12: #{tpu_custom_call.1} parent=5 // pred_fallthru
        _
      %p197 = scmp.lt.s32.totalorder %s14, 2
      // Predicated region
      $region25: #{tpu_custom_call.1} parent=5 // pred_check
        %p198 = pneg %p197
      $region26: #{tpu_custom_call.1} parent=5 // pred_check_branch
        %200 = sbr.rel (%p198) target = $region28
      $region27: #{tpu_custom_call.1} parent=5 // pred_region
        // Predicated region
        $region29: #{tpu_custom_call.1} parent=27 // pred_check
          %p201 = pneg %p48
        $region30: #{tpu_custom_call.1} parent=27 // pred_check_branch
          %203 = sbr.rel (%p201) target = $region32
        $region31: #{tpu_custom_call.1} parent=27 // pred_region
          %s204 = smul.u32 2, %s22
          %p205 = scmp.lt.s32.totalorder %s21, 1
          %s206 = scalar_select %p205, %s21, 1
          %p207 = scmp.lt.s32.totalorder %s204, 1
          %s208 = scalar_select %p207, %s204, 1
          %s209 = smul.addr %s206, 2
          %s210 = sadd.s32 %s208, %s209
          %s211 = smul.addr %s210, 4
          %s212 = scalar_lea.vmem %s0, %s211
          %s213 = smul.u32 2, %s22
        $region32: #{tpu_custom_call.1} parent=27 // pred_fallthru
          _
        // Predicated region
        $region33: #{tpu_custom_call.1} parent=27 // pred_check
          %p214 = pneg %p76
        $region34: #{tpu_custom_call.1} parent=27 // pred_check_branch
          %216 = sbr.rel (%p214) target = $region36
        $region35: #{tpu_custom_call.1} parent=27 // pred_region
          %s217 = smul.u32 2, %s22
          %p218 = scmp.lt.s32.totalorder %s21, 1
          %s219 = scalar_select %p218, %s21, 1
          %p220 = scmp.lt.s32.totalorder %s217, 1
          %s221 = scalar_select %p220, %s217, 1
          %s222 = smul.addr %s219, 2
          %s223 = sadd.s32 %s221, %s222
          %s224 = smul.addr %s223, 4
          %s225 = scalar_lea.vmem %s1, %s224
          %s226 = smul.u32 2, %s22
        $region36: #{tpu_custom_call.1} parent=27 // pred_fallthru
          _
      $region28: #{tpu_custom_call.1} parent=5 // pred_fallthru
        _
      %p227 = scmp.le.s32.totalorder 1, %s14
      %p228 = scmp.lt.s32.totalorder %s14, 3
      %p229 = pnand %p227, %p228
      %p230 = pneg %p229
      // Predicated region
      $region37: #{tpu_custom_call.1} parent=5 // pred_check
        _
      $region38: #{tpu_custom_call.1} parent=5 // pred_check_branch
        %232 = sbr.rel (%p229) target = $region40
      $region39: #{tpu_custom_call.1} parent=5 // pred_region
        %s233 = ssub.s32 %s14, 1
        %s234 = smul.u32 2, %s24
        %p235 = scmp.lt.s32.totalorder %s23, 1
        %s236 = scalar_select %p235, %s23, 1
        %p237 = scmp.lt.s32.totalorder %s234, 1
        %s238 = scalar_select %p237, %s234, 1
        %s239 = smul.addr %s236, 2
        %s240 = sadd.s32 %s238, %s239
        %s241 = smul.addr %s240, 4
        %s242 = scalar_lea.vmem %s0, %s241
        %p243 = pneg %p54
        %p244 = pneg %p51
        %s245 = smul.u32 2, %s24
        %p246 = scmp.lt.s32.totalorder %s23, 1
        %s247 = scalar_select %p246, %s23, 1
        %p248 = scmp.lt.s32.totalorder %s245, 1
        %s249 = scalar_select %p248, %s245, 1
        %s250 = smul.addr %s247, 2
        %s251 = sadd.s32 %s249, %s250
        %s252 = smul.addr %s251, 4
        %s253 = scalar_lea.vmem %s1, %s252
        %p254 = pneg %p82
        %p255 = pneg %p79
        %p256 = pneg %p103
        %p257 = pneg %p100
        %p258 = pneg %p124
        %p259 = pneg %p121
        %p260 = pneg %p145
        %p261 = pneg %p142
        %p262 = pneg %p173
        %p263 = pneg %p170
        %s264 = sand.u32 %s160, 1
        %s265 = scalar_lea.sflag [#allocation3], %s264
        %s266 = sand.u32 %s160, 1
        %s267 = smul.addr %s266, 16
        %s268 = scalar_lea.vmem [#allocation2], %s267
        %s269 = smul.u32 2, %s24
        %p270 = scmp.lt.s32.totalorder %s23, 1
        %s271 = scalar_select %p270, %s23, 1
        %p272 = scmp.lt.s32.totalorder %s269, 1
        %s273 = scalar_select %p272, %s269, 1
        %s274 = smul.addr %s271, 2
        %s275 = sadd.s32 %s273, %s274
        %s276 = smul.addr %s275, 4
        %s277 = scalar_lea.vmem %s0, %s276
        %s278 = smul.u32 2, %s24
        %s279 = smul.u32 2, %s24
        %p280 = scmp.lt.s32.totalorder %s23, 1
        %s281 = scalar_select %p280, %s23, 1
        %p282 = scmp.lt.s32.totalorder %s279, 1
        %s283 = scalar_select %p282, %s279, 1
        %s284 = smul.addr %s281, 2
        %s285 = sadd.s32 %s283, %s284
        %s286 = smul.addr %s285, 4
        %s287 = scalar_lea.vmem %s1, %s286
        %s288 = smul.u32 2, %s24
        %s289 = smul.u32 2, %s24
        %v290 = vld [vmem:[%s277] sm:$0xff]
        %v291 = vmax.f32 %v290, 0.0
        %v292 = vld [vmem:[%s2] sm:$0xff]
        %v293 = vld [vmem:[%s3] sm:$0xff]
        %v294 = vld [vmem:[%s287] sm:$0xff]
        %v296 = vcombine.high %v294, %v294
        %vm297 = vcmask 31744
        %v299 = vsel %vm297, %v293, 0
        %vm301 = vcmask 1043456
        %v302 = vsel %vm301, %v294, 0
        %v304 = vsel %vm301, %v296, 0
        %306 = vmatprep.subr.mxu0 %v304
        %307 = vmatpush1.msra.mxu0 %v302
        %308 = vmatprep.subr.mxu0 0.0
        %309 = vmatpush1.msra.mxu0 0.0
        %310 = vmatprep.subr.mxu0 0.0
        %311 = vmatpush1.msra.mxu0 0.0
        %312 = vmatprep.subr.mxu0 0.0
        %313 = vmatpush1.msra.mxu0 0.0
        %314 = vmatprep.subr.mxu0 0.0
        %315 = vmatpush1.msra.mxu0 0.0
        %316 = vmatprep.subr.mxu0 0.0
        %317 = vmatpush1.msra.mxu0 0.0
        %318 = vmatprep.subr.mxu0 0.0
        %319 = vmatpush1.msra.mxu0 0.0
        %320 = vmatprep.subr.mxu0 0.0
        %321 = vmatpush1.msra.mxu0 0.0
        %322 = vmatprep.subr.mxu0 0.0
        %323 = vmatpush1.msra.mxu0 0.0
        %324 = vmatprep.subr.mxu0 0.0
        %325 = vmatpush1.msra.mxu0 0.0
        %326 = vmatprep.subr.mxu0 0.0
        %327 = vmatpush1.msra.mxu0 0.0
        %328 = vmatprep.subr.mxu0 0.0
        %329 = vmatpush1.msra.mxu0 0.0
        %330 = vmatprep.subr.mxu0 0.0
        %331 = vmatpush1.msra.mxu0 0.0
        %332 = vmatprep.subr.mxu0 0.0
        %333 = vmatpush1.msra.mxu0 0.0
        %334 = vmatprep.subr.mxu0 0.0
        %335 = vmatpush1.msra.mxu0 0.0
        %336 = vmatprep.subr.mxu0 0.0
        %337 = vmatpush1.msra.mxu0 0.0
        %338 = vmatprep.subr.mxu0 0.0
        %339 = vmatpush1.msra.mxu0 0.0
        %340 = vmatprep.subr.mxu0 0.0
        %341 = vmatpush1.msra.mxu0 0.0
        %342 = vmatprep.subr.mxu0 0.0
        %343 = vmatpush1.msra.mxu0 0.0
        %344 = vmatprep.subr.mxu0 0.0
        %345 = vmatpush1.msra.mxu0 0.0
        %346 = vmatprep.subr.mxu0 0.0
        %347 = vmatpush1.msra.mxu0 0.0
        %348 = vmatprep.subr.mxu0 0.0
        %349 = vmatpush1.msra.mxu0 0.0
        %350 = vmatprep.subr.mxu0 0.0
        %351 = vmatpush1.msra.mxu0 0.0
        %352 = vmatprep.subr.mxu0 0.0
        %353 = vmatpush1.msra.mxu0 0.0
        %354 = vmatprep.subr.mxu0 0.0
        %355 = vmatpush1.msra.mxu0 0.0
        %356 = vmatprep.subr.mxu0 0.0
        %357 = vmatpush1.msra.mxu0 0.0
        %358 = vmatprep.subr.mxu0 0.0
        %359 = vmatpush1.msra.mxu0 0.0
        %360 = vmatprep.subr.mxu0 0.0
        %361 = vmatpush1.msra.mxu0 0.0
        %362 = vmatprep.subr.mxu0 0.0
        %363 = vmatpush1.msra.mxu0 0.0
        %364 = vmatprep.subr.mxu0 0.0
        %365 = vmatpush1.msra.mxu0 0.0
        %366 = vmatprep.subr.mxu0 0.0
        %367 = vmatpush1.msra.mxu0 0.0
        %368 = vmatprep.subr.mxu0 0.0
        %369 = vmatpush1.msra.mxu0 0.0
        %370 = vmatprep.mubr.f32.mxu0 0.0
        %371 = vmatmul.mubr.f32.gmra.mrb[0].mxu0 %v299
        %v372 = vpop.f32.mrb[0].mxu0
        %v373 = vadd.f32 0.0, %v372
        %v374 = vpop.f32.mrb[0].mxu0
        %v375 = vadd.f32 0.0, %v374
        %376 = vdwg.mxu0
        %v378 = vcombine.high %v291, %v291
        %v380 = vsel %vm297, %v292, 0
        %v382 = vsel %vm301, %v291, 0
        %v384 = vsel %vm301, %v378, 0
        %386 = vmatprep.subr.mxu0 %v384
        %387 = vmatpush1.msra.mxu0 %v382
        %388 = vmatprep.subr.mxu0 0.0
        %389 = vmatpush1.msra.mxu0 0.0
        %390 = vmatprep.subr.mxu0 0.0
        %391 = vmatpush1.msra.mxu0 0.0
        %392 = vmatprep.subr.mxu0 0.0
        %393 = vmatpush1.msra.mxu0 0.0
        %394 = vmatprep.subr.mxu0 0.0
        %395 = vmatpush1.msra.mxu0 0.0
        %396 = vmatprep.subr.mxu0 0.0
        %397 = vmatpush1.msra.mxu0 0.0
        %398 = vmatprep.subr.mxu0 0.0
        %399 = vmatpush1.msra.mxu0 0.0
        %400 = vmatprep.subr.mxu0 0.0
        %401 = vmatpush1.msra.mxu0 0.0
        %402 = vmatprep.subr.mxu0 0.0
        %403 = vmatpush1.msra.mxu0 0.0
        %404 = vmatprep.subr.mxu0 0.0
        %405 = vmatpush1.msra.mxu0 0.0
        %406 = vmatprep.subr.mxu0 0.0
        %407 = vmatpush1.msra.mxu0 0.0
        %408 = vmatprep.subr.mxu0 0.0
        %409 = vmatpush1.msra.mxu0 0.0
        %410 = vmatprep.subr.mxu0 0.0
        %411 = vmatpush1.msra.mxu0 0.0
        %412 = vmatprep.subr.mxu0 0.0
        %413 = vmatpush1.msra.mxu0 0.0
        %414 = vmatprep.subr.mxu0 0.0
        %415 = vmatpush1.msra.mxu0 0.0
        %416 = vmatprep.subr.mxu0 0.0
        %417 = vmatpush1.msra.mxu0 0.0
        %418 = vmatprep.subr.mxu0 0.0
        %419 = vmatpush1.msra.mxu0 0.0
        %420 = vmatprep.subr.mxu0 0.0
        %421 = vmatpush1.msra.mxu0 0.0
        %422 = vmatprep.subr.mxu0 0.0
        %423 = vmatpush1.msra.mxu0 0.0
        %424 = vmatprep.subr.mxu0 0.0
        %425 = vmatpush1.msra.mxu0 0.0
        %426 = vmatprep.subr.mxu0 0.0
        %427 = vmatpush1.msra.mxu0 0.0
        %428 = vmatprep.subr.mxu0 0.0
        %429 = vmatpush1.msra.mxu0 0.0
        %430 = vmatprep.subr.mxu0 0.0
        %431 = vmatpush1.msra.mxu0 0.0
        %432 = vmatprep.subr.mxu0 0.0
        %433 = vmatpush1.msra.mxu0 0.0
        %434 = vmatprep.subr.mxu0 0.0
        %435 = vmatpush1.msra.mxu0 0.0
        %436 = vmatprep.subr.mxu0 0.0
        %437 = vmatpush1.msra.mxu0 0.0
        %438 = vmatprep.subr.mxu0 0.0
        %439 = vmatpush1.msra.mxu0 0.0
        %440 = vmatprep.subr.mxu0 0.0
        %441 = vmatpush1.msra.mxu0 0.0
        %442 = vmatprep.subr.mxu0 0.0
        %443 = vmatpush1.msra.mxu0 0.0
        %444 = vmatprep.subr.mxu0 0.0
        %445 = vmatpush1.msra.mxu0 0.0
        %446 = vmatprep.subr.mxu0 0.0
        %447 = vmatpush1.msra.mxu0 0.0
        %448 = vmatprep.subr.mxu0 0.0
        %449 = vmatpush1.msra.mxu0 0.0
        %450 = vmatprep.mubr.f32.mxu0 0.0
        %451 = vmatmul.mubr.f32.gmra.mrb[0].mxu0 %v380
        %v452 = vpop.f32.mrb[0].mxu0
        %v453 = vadd.f32 %v373, %v452
        %v454 = vpop.f32.mrb[0].mxu0
        %v455 = vadd.f32 %v375, %v454
        %456 = vdwg.mxu0
        %v457 = vld [vmem:[%s4] sm:$0xff]
        %459 = vset.pattern.permute.xlu0 0
        %460 = vperm.xlu0 %459, %v457
        %v461 = vpop.permute.xlu0 %460
        %v463 = vadd.f32 %v453, %v461
        %v464 = vadd.f32 %v455, %v461
        %465 = vst [vmem:[%s268] sm:$0xff] %v463
        %466 = vst [vmem:[%s268 + $0x8] sm:$0xff] %v464
        %s467 = sand.u32 %s160, 1
        %s468 = scalar_lea.sflag [#allocation3], %s467
        %s469 = sand.u32 %s160, 1
        %s470 = smul.addr %s469, 16
        %s471 = scalar_lea.vmem [#allocation2], %s470
        // Predicated region
        $region41: #{tpu_custom_call.1} parent=39 // pred_check
          %p472 = pneg %p170
        $region42: #{tpu_custom_call.1} parent=39 // pred_check_branch
          %474 = sbr.rel (%p472) target = $region44
        $region43: #{tpu_custom_call.1} parent=39 // pred_region
          %s475 = smul.u32 2, %s24
          %s477 = ssub.s32 256, 256
          %478 = vsyncadd %s468, %s477
          %s479 = smul.addr %s23, 2
          %s480 = sadd.s32 %s475, %s479
          %s481 = smul.addr %s480, 128
          %s482 = scalar_lea.hbm %s5, %s481
          %s484 = sshll.u32 %s471, 4
          %s485 = int_to_ptr.vmem [resolvable:$true] %s484
          %487 = dma.vmem_to_hbm [thread:$0]  %s485, 256, %s482, %s468
        $region44: #{tpu_custom_call.1} parent=39 // pred_fallthru
          _
      $region40: #{tpu_custom_call.1} parent=5 // pred_fallthru
        _
      %p488 = scmp.le.s32.totalorder 2, %s14
      // Predicated region
      $region45: #{tpu_custom_call.1} parent=5 // pred_check
        %p489 = pneg %p488
      $region46: #{tpu_custom_call.1} parent=5 // pred_check_branch
        %491 = sbr.rel (%p489) target = $region48
      $region47: #{tpu_custom_call.1} parent=5 // pred_region
        %s492 = ssub.s32 %s14, 2
        // Predicated region
        $region49: #{tpu_custom_call.1} parent=47 // pred_check
          %p493 = pneg %p176
        $region50: #{tpu_custom_call.1} parent=47 // pred_check_branch
          %495 = sbr.rel (%p493) target = $region52
        $region51: #{tpu_custom_call.1} parent=47 // pred_region
          %s496 = sand.u32 %s161, 1
          %s497 = scalar_lea.sflag [#allocation3], %s496
          %s498 = sand.u32 %s161, 1
          %s499 = smul.addr %s498, 16
          %s500 = scalar_lea.vmem [#allocation2], %s499
          %501 = dma.done %s497, 256
        $region52: #{tpu_custom_call.1} parent=47 // pred_fallthru
          _
      $region48: #{tpu_custom_call.1} parent=5 // pred_fallthru
        _
    $region6: #{tpu_custom_call.1} parent=1 // loop_footer
      %s18 = sadd.s32 1, %s14
    $region7: #{tpu_custom_call.1} parent=1 // loop_footer_branch
      %13 = sbr.rel target = $region3
    $region8: #{tpu_custom_call.1} parent=1 // loop_exit
      _
    %502 = vsyncpa [#allocation3], 1
    %s503 = scalar_lea.sflag [#allocation3], 1
    %504 = vsyncpa %s503, 1

</llo_original>
